<compile_context>
chip_gen: v6e
topology: v6e:2x2x1
jax: 0.10.0
libtpu: 0.0.40
codegen_flags: <defaults>
</compile_context>

<pallas_src>
import functools

import jax
import jax.numpy as jnp
from jax.experimental import pallas as pl
from jax.experimental.pallas import tpu as pltpu

# Deterministic "transforms" parameters (torchvision-style Normalize).
IMAGENET_MEAN = (0.485, 0.456, 0.406)
IMAGENET_STD = (0.229, 0.224, 0.225)

# Per-image elements per grid step.  With u8 in + f32 out, two images and
# double buffering this is ~5 MiB of VMEM per step: inside v5e's 16 MiB
# default scoped limit and far below v7x's 64 MiB physical VMEM.
_MAX_BLOCK_ELEMS = 256 * 1024
# Below this many elements per image, a single block (one grid step) is best.
_SINGLE_BLOCK_ELEMS = 64 * 1024


def _norm2_kernel(scale_ref, bias_ref, c_ref, s_ref, co_ref, so_ref):
    """Fused ToTensor + Normalize for a content/style pair in one launch."""
    scale = scale_ref[...]                      # (rows, 1), broadcast on lanes
    bias = bias_ref[...]
    co_ref[...] = (c_ref[...].astype(jnp.float32) * scale + bias).astype(co_ref.dtype)
    so_ref[...] = (s_ref[...].astype(jnp.float32) * scale + bias).astype(so_ref.dtype)


def _norm1_kernel(scale_ref, bias_ref, x_ref, o_ref):
    o_ref[...] = (x_ref[...].astype(jnp.float32) * scale_ref[...]
                  + bias_ref[...]).astype(o_ref.dtype)


def _choose_lane_tile(rows, lanes):
    """Lane-axis tile: multiple of 128 (unless whole axis), VMEM-capped, and
    >= 2 tiles for large images so v7x megacore sharding has work per core."""
    if rows * lanes <= _SINGLE_BLOCK_ELEMS:
        return lanes                                     # tiny: single block
    budget = max(128, (_MAX_BLOCK_ELEMS // rows) // 128 * 128)   # VMEM cap
    half = pl.cdiv(pl.cdiv(lanes, 2), 128) * 128                 # >= 2 tiles
    return min(budget, half)


def _launch_normalize(imgs, scale_col, bias_col, out_dtype):
    """One pallas_call normalizing all images (all share one packed 2-D shape)."""
    rows, lanes = imgs[0].shape
    tile = _choose_lane_tile(rows, lanes)
    n_tiles = pl.cdiv(lanes, tile)                # partial last block is masked

    vec_spec = pl.BlockSpec((rows, 1), lambda i: (0, 0))        # scale / bias
    img_spec = pl.BlockSpec((rows, tile), lambda i: (0, i))     # u8 in / out

    multi = len(imgs) > 1
    kernel = _norm2_kernel if multi else _norm1_kernel
    out_shape = tuple(jax.ShapeDtypeStruct((rows, lanes), out_dtype) for _ in imgs)
    out_specs = tuple(img_spec for _ in imgs)
    if not multi:
        out_shape, out_specs = out_shape[0], out_specs[0]

    out = pl.pallas_call(
        kernel,
        out_shape=out_shape,
        grid=(n_tiles,),
        in_specs=[vec_spec, vec_spec] + [img_spec] * len(imgs),
        out_specs=out_specs,
        compiler_params=pltpu.CompilerParams(
            dimension_semantics=("parallel",)),   # shards across v7x's 2 TCs
    )(scale_col, bias_col, *imgs)
    return out if multi else (out,)


def _pack_factor(pixels):
    """Sublane packing: (C, P) -> (C*sub, P//sub) as a free row-major reshape."""
    for sub in (32, 16, 8):                    # deep packing + full 128 lanes
        if pixels % (sub * 128) == 0:
            return sub
    for sub in (8, 4, 2):                      # keep >= 128 lanes when possible
        if pixels % sub == 0 and pixels // sub >= 128:
            return sub
    return 1


def _nearest_resize_hwc(img_hwc, size):
    """PIL-style resize(size=(width, height)) with nearest-neighbour sampling."""
    # TODO(synk): PIL/torchvision default resize uses bilinear/bicubic with
    # antialiasing; nearest-neighbour is the deterministic stand-in here.
    out_w, out_h = size
    h, w, _ = img_hwc.shape
    row_idx = jnp.clip(jnp.floor((jnp.arange(out_h) + 0.5) * h / out_h)
                       .astype(jnp.int32), 0, h - 1)
    col_idx = jnp.clip(jnp.floor((jnp.arange(out_w) + 0.5) * w / out_w)
                       .astype(jnp.int32), 0, w - 1)
    return img_hwc[row_idx[:, None], col_idx[None, :], :]   # one uint8 gather


def _to_packed_chw_u8(img_hwc_u8, resize):
    """resize (u8) + HWC->CHW (u8) + free reshape to a sublane-packed 2-D view."""
    # TODO(synk): the HWC->CHW transpose could additionally be folded into the
    # Pallas kernel (XLU transpose on the VMEM tile) to drop one uint8 HBM
    # pass; with C=3 it is kept as a small uint8 XLA fusion under jit instead.
    img = img_hwc_u8
    if resize is not None:
        img = _nearest_resize_hwc(img, resize)
    h, w, c = img.shape
    pixels = h * w
    sub = _pack_factor(pixels)
    packed = jnp.transpose(img, (2, 0, 1)).reshape(c * sub, pixels // sub)
    return packed, (c, h, w), sub


@functools.partial(jax.jit,
                   static_argnames=("resize", "mean", "std", "out_dtype"))
def data_preprocess_forward(content_hwc_u8, style_hwc_u8, resize=(16, 16),
                            mean=IMAGENET_MEAN, std=IMAGENET_STD,
                            out_dtype=jnp.float32):
    """JAX/Pallas equivalent of data_preprocess.forward.

    Returns {'content': (1,C,H,W), 'style': (1,C,H,W)} in `out_dtype`.
    """
    # TODO(synk): PIL Image.open (host file I/O / JPEG decode) has no Pallas
    # equivalent; images are supplied as decoded uint8 HWC arrays instead.
    mean_v = jnp.asarray(mean, jnp.float32)
    std_v = jnp.asarray(std, jnp.float32)
    scale = 1.0 / (255.0 * std_v)        # fused ToTensor(1/255) * Normalize(1/std)
    bias = -mean_v / std_v

    c_flat, c_chw, c_sub = _to_packed_chw_u8(content_hwc_u8, resize)
    s_flat, s_chw, s_sub = _to_packed_chw_u8(style_hwc_u8, resize)

    def cols(sub):
        return jnp.repeat(scale, sub)[:, None], jnp.repeat(bias, sub)[:, None]

    if c_flat.shape == s_flat.shape:
        sc, bc = cols(c_sub)
        c_out, s_out = _launch_normalize([c_flat, s_flat], sc, bc, out_dtype)
    else:
        # resize=None with differently sized images: two separate launches.
        sc, bc = cols(c_sub)
        (c_out,) = _launch_normalize([c_flat], sc, bc, out_dtype)
        sc, bc = cols(s_sub)
        (s_out,) = _launch_normalize([s_flat], sc, bc, out_dtype)

    content = c_out.reshape(1, *c_chw)   # free row-major un-pack to (1,C,H,W)
    style = s_out.reshape(1, *s_chw)
    return {"content": content, "style": style}


if __name__ == "__main__":
    key = jax.random.PRNGKey(0)
    k_c, k_s = jax.random.split(key)

    # Small synthetic "decoded images": uint8 HWC, different raw sizes.
    content_img = jax.random.randint(k_c, (20, 24, 3), 0, 256,
                                     dtype=jnp.int32).astype(jnp.uint8)
    style_img = jax.random.randint(k_s, (18, 30, 3), 0, 256,
                                   dtype=jnp.int32).astype(jnp.uint8)

    def ref(img_u8, size):
        img = _nearest_resize_hwc(img_u8, size).astype(jnp.float32)
        chw = jnp.transpose(img, (2, 0, 1)) / 255.0
        m = jnp.asarray(IMAGENET_MEAN, jnp.float32)[:, None, None]
        s = jnp.asarray(IMAGENET_STD, jnp.float32)[:, None, None]
        return ((chw - m) / s)[None]

    # Default path: 16x16 resize — single block, one launch, 2 inputs / 2 outputs.
    out = jax.block_until_ready(
        data_preprocess_forward(content_img, style_img, resize=(16, 16)))
    assert out["content"].shape == (1, 3, 16, 16)
    assert out["style"].shape == (1, 3, 16, 16)
    assert out["content"].dtype == jnp.float32
    assert out["style"].dtype == jnp.float32
    assert jnp.allclose(out["content"], ref(content_img, (16, 16)), atol=1e-5)
    assert jnp.allclose(out["style"], ref(style_img, (16, 16)), atol=1e-5)

    # Larger resize exercises the sublane-packed, lane-tiled grid path
    # (>= 2 "parallel" tiles, masked partial last block).
    out2 = jax.block_until_ready(
        data_preprocess_forward(content_img, style_img, resize=(160, 160)))
    assert out2["content"].shape == (1, 3, 160, 160)
    assert out2["style"].shape == (1, 3, 160, 160)
    assert jnp.allclose(out2["content"], ref(content_img, (160, 160)), atol=1e-5)
    assert jnp.allclose(out2["style"], ref(style_img, (160, 160)), atol=1e-5)

    print("KERNEL_OK")
</pallas_src>

<mosaic_0001>
module attributes {stable_mosaic.version = 11 : i64} {
  func.func @_norm2_kernel(%arg0: i32, %arg1: memref<6x1xf32, #tpu.memory_space<vmem>>, %arg2: memref<6x1xf32, #tpu.memory_space<vmem>>, %arg3: memref<6x128xi8, #tpu.memory_space<vmem>>, %arg4: memref<6x128xi8, #tpu.memory_space<vmem>>, %arg5: memref<6x128xf32, #tpu.memory_space<vmem>>, %arg6: memref<6x128xf32, #tpu.memory_space<vmem>>) attributes {dimension_semantics = [#tpu.dimension_semantics<parallel>], iteration_bounds = array<i64: 1>, scalar_prefetch = 0 : i64, scratch_operands = 0 : i64, tpu.core_type = #tpu.core_type<tc>, window_params = [{pipeline_mode = #tpu.pipeline_mode<synchronous>, transform_indices = @transform_0, window_bounds = array<i64: 6, 1>}, {pipeline_mode = #tpu.pipeline_mode<synchronous>, transform_indices = @transform_1, window_bounds = array<i64: 6, 1>}, {transform_indices = @transform_2, window_bounds = array<i64: 6, 128>}, {transform_indices = @transform_3, window_bounds = array<i64: 6, 128>}, {transform_indices = @transform_4, window_bounds = array<i64: 6, 128>}, {transform_indices = @transform_5, window_bounds = array<i64: 6, 128>}]} {
    %c0 = arith.constant 0 : index
    %c0_0 = arith.constant 0 : index
    %0 = vector.load %arg1[%c0, %c0_0] : memref<6x1xf32, #tpu.memory_space<vmem>>, vector<6x1xf32>
    %c0_1 = arith.constant 0 : index
    %c0_2 = arith.constant 0 : index
    %1 = vector.load %arg2[%c0_1, %c0_2] : memref<6x1xf32, #tpu.memory_space<vmem>>, vector<6x1xf32>
    %c0_3 = arith.constant 0 : index
    %c0_4 = arith.constant 0 : index
    %2 = vector.load %arg3[%c0_3, %c0_4] : memref<6x128xi8, #tpu.memory_space<vmem>>, vector<6x128xi8>
    %3 = arith.uitofp %2 : vector<6x128xi8> to vector<6x128xf32>
    %4 = vector.broadcast %0 : vector<6x1xf32> to vector<6x128xf32>
    %5 = arith.mulf %3, %4 : vector<6x128xf32>
    %6 = vector.broadcast %1 : vector<6x1xf32> to vector<6x128xf32>
    %7 = arith.addf %5, %6 : vector<6x128xf32>
    %c0_5 = arith.constant 0 : index
    %c0_6 = arith.constant 0 : index
    %8 = vector.load %arg5[%c0_5, %c0_6] : memref<6x128xf32, #tpu.memory_space<vmem>>, vector<6x128xf32>
    tpu.vector_store %arg5[%c0_5, %c0_6], %7 {strides = array<i32>} : memref<6x128xf32, #tpu.memory_space<vmem>>, vector<6x128xf32>,
    %c0_7 = arith.constant 0 : index
    %c0_8 = arith.constant 0 : index
    %9 = vector.load %arg4[%c0_7, %c0_8] : memref<6x128xi8, #tpu.memory_space<vmem>>, vector<6x128xi8>
    %10 = arith.uitofp %9 : vector<6x128xi8> to vector<6x128xf32>
    %11 = vector.broadcast %0 : vector<6x1xf32> to vector<6x128xf32>
    %12 = arith.mulf %10, %11 : vector<6x128xf32>
    %13 = vector.broadcast %1 : vector<6x1xf32> to vector<6x128xf32>
    %14 = arith.addf %12, %13 : vector<6x128xf32>
    %c0_9 = arith.constant 0 : index
    %c0_10 = arith.constant 0 : index
    %15 = vector.load %arg6[%c0_9, %c0_10] : memref<6x128xf32, #tpu.memory_space<vmem>>, vector<6x128xf32>
    tpu.vector_store %arg6[%c0_9, %c0_10], %14 {strides = array<i32>} : memref<6x128xf32, #tpu.memory_space<vmem>>, vector<6x128xf32>,
    return
  }
  func.func @transform_0(%arg0: i32) -> (i32, i32) {
    %c0_i32 = arith.constant 0 : i32
    %c0_i32_0 = arith.constant 0 : i32
    %c0_i32_1 = arith.constant 0 : i32
    return %c0_i32, %c0_i32_0 : i32, i32
  }
  func.func @transform_1(%arg0: i32) -> (i32, i32) {
    %c0_i32 = arith.constant 0 : i32
    %c0_i32_0 = arith.constant 0 : i32
    %c0_i32_1 = arith.constant 0 : i32
    return %c0_i32, %c0_i32_0 : i32, i32
  }
  func.func @transform_2(%arg0: i32) -> (i32, i32) {
    %c0_i32 = arith.constant 0 : i32
    %c0_i32_0 = arith.constant 0 : i32
    return %c0_i32, %arg0 : i32, i32
  }
  func.func @transform_3(%arg0: i32) -> (i32, i32) {
    %c0_i32 = arith.constant 0 : i32
    %c0_i32_0 = arith.constant 0 : i32
    return %c0_i32, %arg0 : i32, i32
  }
  func.func @transform_4(%arg0: i32) -> (i32, i32) {
    %c0_i32 = arith.constant 0 : i32
    %c0_i32_0 = arith.constant 0 : i32
    return %c0_i32, %arg0 : i32, i32
  }
  func.func @transform_5(%arg0: i32) -> (i32, i32) {
    %c0_i32 = arith.constant 0 : i32
    %c0_i32_0 = arith.constant 0 : i32
    return %c0_i32, %arg0 : i32, i32
  }
}

</mosaic_0001>

<llo_original>
// kernel: data_preprocess_forward.1
$region0: #{data_preprocess_forward.1}
  #allocation0 [shape = 'u32[]', space=smem, size = 0x4, offset = 0x4, fixed_abs, tag = 'smem constant byte address 0x4 - core index']
  #allocation1 [shape = 'u32[144,128]{1,0:T(1,128)}', space=vmem, size = 0x12000, scoped, tag = 'internal scratch']
  %s0 = inlined_call_operand.vmem [shape: f32[6,1], index: 0, kind: input, shape index: {}]
  %s1 = inlined_call_operand.vmem [shape: f32[6,1], index: 1, kind: input, shape index: {}]
  %s2 = inlined_call_operand.vmem [shape: u8[6,128], index: 2, kind: input, shape index: {}]
  %s3 = inlined_call_operand.vmem [shape: u8[6,128], index: 3, kind: input, shape index: {}]
  %s4 = inlined_call_operand.vmem [shape: f32[6,128], index: 4, kind: output, shape index: {0}]
  %s5 = inlined_call_operand.vmem [shape: f32[6,128], index: 5, kind: output, shape index: {1}]
  %6 = xla_tuple %s4, %s5
  %s7 = sld [smem:[#allocation0]]
  $region34: #{data_preprocess_forward.1} parent=0
    _
  %s9 = ssub.s32 1, %s7
  %s10 = scalar_select 0, %s9, %s7
  // Predicated region
  $region2: #{data_preprocess_forward.1} parent=0 // pred_check
    _
  $region3: #{data_preprocess_forward.1} parent=0 // pred_check_branch
    %12 = sbr.rel (0) target = $region5
  $region4: #{data_preprocess_forward.1} parent=0 // pred_region
    _
  $region5: #{data_preprocess_forward.1} parent=0 // pred_fallthru
    _
  // Predicated region
  $region6: #{data_preprocess_forward.1} parent=0 // pred_check
    _
  $region7: #{data_preprocess_forward.1} parent=0 // pred_check_branch
    %14 = sbr.rel (0) target = $region9
  $region8: #{data_preprocess_forward.1} parent=0 // pred_region
    _
  $region9: #{data_preprocess_forward.1} parent=0 // pred_fallthru
    _
  // Predicated region
  $region10: #{data_preprocess_forward.1} parent=0 // pred_check
    _
  $region11: #{data_preprocess_forward.1} parent=0 // pred_check_branch
    %16 = sbr.rel (0) target = $region13
  $region12: #{data_preprocess_forward.1} parent=0 // pred_region
    _
  $region13: #{data_preprocess_forward.1} parent=0 // pred_fallthru
    _
  // Predicated region
  $region14: #{data_preprocess_forward.1} parent=0 // pred_check
    _
  $region15: #{data_preprocess_forward.1} parent=0 // pred_check_branch
    %18 = sbr.rel (0) target = $region17
  $region16: #{data_preprocess_forward.1} parent=0 // pred_region
    _
  $region17: #{data_preprocess_forward.1} parent=0 // pred_fallthru
    _
  %v19 = vld [vmem:[%s0] sm:$0x3f]
  %v20 = vld [vmem:[%s1] sm:$0x3f]
  %v21 = vld [vmem:[%s2] sm:$0x3]
  %v22 = vunpack.c.0.s8 %v21
  %v23 = vand.u32 %v22, 255
  %v24 = vcvt.s32.f32 %v23
  %26 = vset.pattern.permute.xlu0 0
  %27 = vperm.xlu0 %26, %v19
  %v28 = vpop.permute.xlu0 %27
  %v30 = vmul.f32 %v24, %v28
  %32 = vset.pattern.permute.xlu0 0
  %33 = vperm.xlu0 %32, %v20
  %v34 = vpop.permute.xlu0 %33
  %v36 = vadd.f32 %v30, %v34
  %37 = vst [vmem:[%s4] sm:$0x3f] %v36
  %v38 = vld [vmem:[%s3] sm:$0x3]
  %v39 = vunpack.c.0.s8 %v38
  %v40 = vand.u32 %v39, 255
  %v41 = vcvt.s32.f32 %v40
  %v42 = vmul.f32 %v41, %v28
  %v43 = vadd.f32 %v42, %v34
  %44 = vst [vmem:[%s5] sm:$0x3f] %v43
  // Predicated region
  $region18: #{data_preprocess_forward.1} parent=0 // pred_check
    _
  $region19: #{data_preprocess_forward.1} parent=0 // pred_check_branch
    %46 = sbr.rel (0) target = $region21
  $region20: #{data_preprocess_forward.1} parent=0 // pred_region
    _
  $region21: #{data_preprocess_forward.1} parent=0 // pred_fallthru
    _
  // Predicated region
  $region22: #{data_preprocess_forward.1} parent=0 // pred_check
    _
  $region23: #{data_preprocess_forward.1} parent=0 // pred_check_branch
    %48 = sbr.rel (0) target = $region25
  $region24: #{data_preprocess_forward.1} parent=0 // pred_region
    _
  $region25: #{data_preprocess_forward.1} parent=0 // pred_fallthru
    _
  // Predicated region
  $region26: #{data_preprocess_forward.1} parent=0 // pred_check
    _
  $region27: #{data_preprocess_forward.1} parent=0 // pred_check_branch
    %50 = sbr.rel (0) target = $region29
  $region28: #{data_preprocess_forward.1} parent=0 // pred_region
    _
  $region29: #{data_preprocess_forward.1} parent=0 // pred_fallthru
    _
  // Predicated region
  $region30: #{data_preprocess_forward.1} parent=0 // pred_check
    _
  $region31: #{data_preprocess_forward.1} parent=0 // pred_check_branch
    %52 = sbr.rel (0) target = $region33
  $region32: #{data_preprocess_forward.1} parent=0 // pred_region
    _
  $region33: #{data_preprocess_forward.1} parent=0 // pred_fallthru
    _

</llo_original>
